<compile_context>
chip_gen: v5e
topology: v5e:2x2
jax: 0.10.0
libtpu: 0.0.40
codegen_flags: <defaults>
</compile_context>

<pallas_src>
import functools

import jax
import jax.numpy as jnp
import numpy as np
from jax.experimental import pallas as pl
from jax.experimental.pallas import tpu as pltpu


# ----------------------------------------------------------------------------
# Kernel 1: Initializer — masked mean (as MXU dot) + tanh(Linear) for [h0|c0]
# ----------------------------------------------------------------------------
def _init_kernel(he_ref, mask_ref, w_ref, b_ref, out_ref):
    f32 = jnp.float32
    he = he_ref[0]                                            # (S, He)
    m = mask_ref[0]                                           # (1, S)
    summed = jnp.dot(m, he, preferred_element_type=f32)       # (1, He) on MXU
    cnt = jnp.maximum(jnp.sum(m, axis=-1, keepdims=True), 1.0)
    mean = summed * pl.reciprocal(cnt, approx=True)
    out_ref[0] = jnp.tanh(
        jnp.dot(mean, w_ref[...], preferred_element_type=f32) + b_ref[...])


# ----------------------------------------------------------------------------
# Kernel 2: length-masked LSTM over the target sequence.
#   Grid = time chunks; per chunk the input projection is one big MXU matmul
#   and the serial loop only has h_prev @ W_hh + elementwise gate math.
# ----------------------------------------------------------------------------
def _lstm_kernel(len_ref, x_ref, h0_ref, c0_ref, wih_ref, whh_ref, b_ref,
                 hd_ref, h_sc, c_sc, *, t_chunk):
    f32 = jnp.float32
    chunk = pl.program_id(0)

    @pl.when(chunk == 0)
    def _():
        h_sc[...] = h0_ref[...]
        c_sc[...] = c0_ref[...]

    # Hoisted input projection for the whole chunk (off the critical path).
    x = x_ref[...]                                            # (B, TC, E)
    B, TC, E = x.shape
    G = wih_ref.shape[1]                                      # 4H
    gx = jnp.dot(x.reshape(B * TC, E), wih_ref[...],
                 preferred_element_type=f32) + b_ref[...]     # (B*TC, 4H)
    gx = gx.reshape(B, TC, G)

    H = h0_ref.shape[-1]
    wh = whh_ref[...]
    lens = len_ref[...]                                       # (B, 1) int32
    h = h_sc[...]
    c = c_sc[...]
    for tt in range(t_chunk):                                 # short static unroll
        gates = gx[:, tt, :] + jnp.dot(h, wh, preferred_element_type=f32)
        i = jax.nn.sigmoid(gates[:, 0 * H:1 * H])
        f = jax.nn.sigmoid(gates[:, 1 * H:2 * H])
        g = jnp.tanh(gates[:, 2 * H:3 * H])
        o = jax.nn.sigmoid(gates[:, 3 * H:4 * H])
        c_new = f * c + i * g
        h_new = o * jnp.tanh(c_new)
        valid = (chunk * t_chunk + tt) < lens                 # (B, 1) bool
        c = jnp.where(valid, c_new, c)
        h = jnp.where(valid, h_new, h)
        hd_ref[:, tt, :] = jnp.where(valid, h_new, 0.0)       # pad_packed pads 0
    h_sc[...] = h
    c_sc[...] = c


# ----------------------------------------------------------------------------
# Kernel 3: per-batch decode heads — predict_act, attention, context, hidden,
#           predict_tok, switcher_copy, copy-mechanism mixture.
# ----------------------------------------------------------------------------
def _decode_kernel(hd_ref, he_ref, mask_ref, temb_ref, ptr_ref,
                   w_act_ref, b_act_ref, w_att_ref,
                   w_hid_h_ref, w_hid_c_ref, b_hid_ref,
                   w_tok_ref, b_tok_ref,
                   w_sw_h_ref, w_sw_c_ref, w_sw_e_ref, b_sw_ref,
                   pred_act_ref, prob_ref, alpha_ref):
    f32 = jnp.float32
    hd = hd_ref[0]        # (T, H)
    he = he_ref[0]        # (S, He)
    mask = mask_ref[0]    # (1, S)
    temb = temb_ref[0]    # (T, E)
    ptr = ptr_ref[0]      # (S, 1) int32

    # pred_act = softmax(Linear(h_d))
    act_logits = (jnp.dot(hd, w_act_ref[...], preferred_element_type=f32)
                  + b_act_ref[...])
    act_logits = act_logits - jnp.max(act_logits, axis=-1, keepdims=True)
    act_exp = jnp.exp(act_logits)
    pred_act = act_exp * pl.reciprocal(
        jnp.sum(act_exp, axis=-1, keepdims=True), approx=True)

    # attention: bilinear scores + masked softmax (mask fill & max-sub in f32)
    proj = jnp.dot(hd, w_att_ref[...], preferred_element_type=f32)           # (T, He)
    scores = jax.lax.dot_general(proj, he, (((1,), (1,)), ((), ())),
                                 preferred_element_type=f32)                 # (T, S)
    scores = jnp.where(mask > 0.0, scores, jnp.float32(-1e9))
    scores = scores - jnp.max(scores, axis=-1, keepdims=True)
    sexp = jnp.exp(scores)
    alpha = sexp * pl.reciprocal(
        jnp.sum(sexp, axis=-1, keepdims=True), approx=True)                  # (T, S)

    # context = bmm(alpha, h_e)
    context = jnp.dot(alpha, he, preferred_element_type=f32)                 # (T, He)

    # hidden = tanh(hd @ W_hid[:H] + context @ W_hid[H:] + b)   (no concat)
    hidden = jnp.tanh(
        jnp.dot(hd, w_hid_h_ref[...], preferred_element_type=f32)
        + jnp.dot(context, w_hid_c_ref[...], preferred_element_type=f32)
        + b_hid_ref[...])

    # pred_tok = softmax(Linear(hidden))
    tok_logits = (jnp.dot(hidden, w_tok_ref[...], preferred_element_type=f32)
                  + b_tok_ref[...])
    tok_logits = tok_logits - jnp.max(tok_logits, axis=-1, keepdims=True)
    texp = jnp.exp(tok_logits)
    pred_tok = texp * pl.reciprocal(
        jnp.sum(texp, axis=-1, keepdims=True), approx=True)                  # (T, V)

    # switcher = sigmoid(hd@Wh + context@Wc + temb@We + b)      (no concat)
    switcher = jax.nn.sigmoid(
        jnp.dot(hd, w_sw_h_ref[...], preferred_element_type=f32)
        + jnp.dot(context, w_sw_c_ref[...], preferred_element_type=f32)
        + jnp.dot(temb, w_sw_e_ref[...], preferred_element_type=f32)
        + b_sw_ref[...])                                                     # (T, 1)

    # prob_copy = (1 - switcher) * bmm(alpha, oneHot(LVT.Pointer, pool))
    # TODO(synk): for production pool sizes, tile the pool axis and build the
    #   one-hot / alpha operands in bf16 (exact for 0/1) to bound VMEM & FLOPs.
    S_ = ptr.shape[0]
    pool = prob_ref.shape[-1]
    lane_ids = jax.lax.broadcasted_iota(jnp.int32, (S_, pool), 1)
    pointer_oh = (lane_ids == ptr).astype(f32)                               # (S, pool)
    prob_copy = (jnp.float32(1.0) - switcher) * jnp.dot(
        alpha, pointer_oh, preferred_element_type=f32)                       # (T, pool)

    pred_act_ref[...] = pred_act[None]
    alpha_ref[...] = alpha[None]

    # prob = switcher * [pred_tok | 0] + prob_copy, written without a zero-pad
    # concat: lane-dense store of the copy term, then add the vocab slab into
    # the first V lanes.
    V = pred_tok.shape[-1]
    prob_ref[0] = prob_copy
    prob_ref[0, :, :V] = prob_copy[:, :V] + switcher * pred_tok


# ----------------------------------------------------------------------------
# Wrapper (layout plumbing + pallas_call setup)
# ----------------------------------------------------------------------------
def _pick_time_chunk(T):
    for cand in (32, 16, 8):
        if T % cand == 0:
            return cand
    return T  # full extent (block dim == full array dim is always legal)


def decoder_flatparse_forward(params, pool_size, lvt_pointer,
                              h_e, source_mask, target_emb, len_target):
    f32 = jnp.float32
    B, S, He = h_e.shape
    _, T, E = target_emb.shape
    H = params['W_hh'].shape[0]
    A = params['W_act'].shape[1]
    Hh = params['W_hid'].shape[1]
    V = params['W_tok'].shape[1]
    assert pool_size > V, "module assumes LVT.size > vocab size"
    # Targets assumed right-padded with len_target <= T (pack_padded_sequence).

    mask_f = source_mask.astype(f32)

    # ---- Initializer (per-batch grid, fused [W_h0|W_c0]) --------------------
    w_init = jnp.concatenate([params['W_h0'], params['W_c0']], axis=1)   # (He,2H)
    b_init = jnp.concatenate([params['b_h0'], params['b_c0']], axis=1)   # (1,2H)
    h0c0 = pl.pallas_call(
        _init_kernel,
        grid=(B,),
        in_specs=[
            pl.BlockSpec((1, S, He), lambda b: (b, 0, 0)),
            pl.BlockSpec((1, 1, S), lambda b: (b, 0, 0)),
            pl.BlockSpec((He, 2 * H), lambda b: (0, 0)),
            pl.BlockSpec((1, 2 * H), lambda b: (0, 0)),
        ],
        out_specs=pl.BlockSpec((1, 1, 2 * H), lambda b: (b, 0, 0)),
        out_shape=jax.ShapeDtypeStruct((B, 1, 2 * H), f32),
        compiler_params=pltpu.CompilerParams(dimension_semantics=("parallel",)),
    )(h_e, mask_f[:, None, :], w_init, b_init)
    h0 = h0c0[:, 0, :H]
    c0 = h0c0[:, 0, H:]

    # ---- LSTM over target_emb (packed-sequence semantics via length mask) ---
    t_chunk = _pick_time_chunk(T)
    n_chunks = T // t_chunk
    len_i32 = len_target.astype(jnp.int32)[:, None]          # (B, 1)

    h_d = pl.pallas_call(
        functools.partial(_lstm_kernel, t_chunk=t_chunk),
        grid=(n_chunks,),
        in_specs=[
            pl.BlockSpec((B, 1), lambda c: (0, 0)),              # lengths
            pl.BlockSpec((B, t_chunk, E), lambda c: (0, c, 0)),  # target_emb chunk
            pl.BlockSpec((B, H), lambda c: (0, 0)),              # h0
            pl.BlockSpec((B, H), lambda c: (0, 0)),              # c0
            pl.BlockSpec((E, 4 * H), lambda c: (0, 0)),          # W_ih
            pl.BlockSpec((H, 4 * H), lambda c: (0, 0)),          # W_hh
            pl.BlockSpec((1, 4 * H), lambda c: (0, 0)),          # b
        ],
        out_specs=pl.BlockSpec((B, t_chunk, H), lambda c: (0, c, 0)),
        out_shape=jax.ShapeDtypeStruct((B, T, H), f32),
        scratch_shapes=[pltpu.VMEM((B, H), f32), pltpu.VMEM((B, H), f32)],
        compiler_params=pltpu.CompilerParams(dimension_semantics=("arbitrary",)),
    )(len_i32, target_emb, h0, c0,
      params['W_ih'], params['W_hh'], params['b_lstm'])
    # ph_d / pc_d intentionally not produced: only needed when hidden_prev is
    # not None, which is the (unimplemented) incremental-decoding branch.

    # ---- decode heads (one batch element per grid step) ---------------------
    w_hid_h = params['W_hid'][:H]
    w_hid_c = params['W_hid'][H:]
    w_sw_h = params['W_sw'][:H]
    w_sw_c = params['W_sw'][H:H + He]
    w_sw_e = params['W_sw'][H + He:]

    pred_act, prob, alpha = pl.pallas_call(
        _decode_kernel,
        grid=(B,),
        in_specs=[
            pl.BlockSpec((1, T, H), lambda b: (b, 0, 0)),           # h_d
            pl.BlockSpec((1, S, He), lambda b: (b, 0, 0)),          # h_e
            pl.BlockSpec((1, 1, S), lambda b: (b, 0, 0)),           # source_mask
            pl.BlockSpec((1, T, E), lambda b: (b, 0, 0)),           # target_emb
            pl.BlockSpec((1, S, 1), lambda b: (b, 0, 0)),           # LVT.Pointer
            pl.BlockSpec((H, A), lambda b: (0, 0)),                 # W_act
            pl.BlockSpec((1, A), lambda b: (0, 0)),                 # b_act
            pl.BlockSpec((H, He), lambda b: (0, 0)),                # W_att
            pl.BlockSpec((H, Hh), lambda b: (0, 0)),                # W_hid[:H]
            pl.BlockSpec((He, Hh), lambda b: (0, 0)),               # W_hid[H:]
            pl.BlockSpec((1, Hh), lambda b: (0, 0)),                # b_hid
            pl.BlockSpec((Hh, V), lambda b: (0, 0)),                # W_tok
            pl.BlockSpec((1, V), lambda b: (0, 0)),                 # b_tok
            pl.BlockSpec((H, 1), lambda b: (0, 0)),                 # W_sw[:H]
            pl.BlockSpec((He, 1), lambda b: (0, 0)),                # W_sw[H:H+He]
            pl.BlockSpec((E, 1), lambda b: (0, 0)),                 # W_sw[H+He:]
            pl.BlockSpec((1, 1), lambda b: (0, 0)),                 # b_sw
        ],
        out_specs=[
            pl.BlockSpec((1, T, A), lambda b: (b, 0, 0)),
            pl.BlockSpec((1, T, pool_size), lambda b: (b, 0, 0)),
            pl.BlockSpec((1, T, S), lambda b: (b, 0, 0)),
        ],
        out_shape=(jax.ShapeDtypeStruct((B, T, A), f32),
                   jax.ShapeDtypeStruct((B, T, pool_size), f32),
                   jax.ShapeDtypeStruct((B, T, S), f32)),
        compiler_params=pltpu.CompilerParams(dimension_semantics=("parallel",)),
    )(h_d, h_e, mask_f[:, None, :], target_emb,
      lvt_pointer.astype(jnp.int32)[:, :, None],
      params['W_act'], params['b_act'], params['W_att'],
      w_hid_h, w_hid_c, params['b_hid'], params['W_tok'], params['b_tok'],
      w_sw_h, w_sw_c, w_sw_e, params['b_sw'])

    return [pred_act, prob, alpha], []


# ----------------------------------------------------------------------------
# Pure-JAX reference (correctness oracle)
# ----------------------------------------------------------------------------
def reference_forward(params, pool_size, lvt_pointer,
                      h_e, source_mask, target_emb, len_target):
    f32 = jnp.float32
    mask = source_mask.astype(f32)
    denom = jnp.maximum(jnp.sum(mask, axis=1, keepdims=True), 1.0)
    mean = jnp.sum(h_e * mask[:, :, None], axis=1) / denom
    h0 = jnp.tanh(mean @ params['W_h0'] + params['b_h0'])
    c0 = jnp.tanh(mean @ params['W_c0'] + params['b_c0'])

    B, T, E = target_emb.shape
    H = h0.shape[-1]

    def step(carry, inp):
        h, c = carry
        x_t, t = inp
        gates = x_t @ params['W_ih'] + h @ params['W_hh'] + params['b_lstm']
        i = jax.nn.sigmoid(gates[:, 0:H])
        f = jax.nn.sigmoid(gates[:, H:2 * H])
        g = jnp.tanh(gates[:, 2 * H:3 * H])
        o = jax.nn.sigmoid(gates[:, 3 * H:4 * H])
        c_new = f * c + i * g
        h_new = o * jnp.tanh(c_new)
        valid = (t < len_target)[:, None]
        c = jnp.where(valid, c_new, c)
        h = jnp.where(valid, h_new, h)
        out = jnp.where(valid, h_new, 0.0)
        return (h, c), out

    (_, _), hd_tm = jax.lax.scan(
        step, (h0, c0), (jnp.transpose(target_emb, (1, 0, 2)), jnp.arange(T)))
    h_d = jnp.transpose(hd_tm, (1, 0, 2))

    pred_act = jax.nn.softmax(h_d @ params['W_act'] + params['b_act'], axis=-1)
    scores = jnp.einsum('bth,he,bse->bts', h_d, params['W_att'], h_e)
    scores = jnp.where(mask[:, None, :] > 0, scores, -1e9)
    alpha = jax.nn.softmax(scores, axis=-1)
    context = jnp.einsum('bts,bse->bte', alpha, h_e)
    hidden = jnp.tanh(jnp.concatenate([h_d, context], axis=-1) @ params['W_hid']
                      + params['b_hid'])
    pred_tok = jax.nn.softmax(hidden @ params['W_tok'] + params['b_tok'], axis=-1)
    switcher = jax.nn.sigmoid(
        jnp.concatenate([h_d, context, target_emb], axis=-1) @ params['W_sw']
        + params['b_sw'])
    V = pred_tok.shape[-1]
    pred_tok_pad = jnp.pad(pred_tok, ((0, 0), (0, 0), (0, pool_size - V)))
    prob_vocab = switcher * pred_tok_pad
    pointer_oh = jax.nn.one_hot(lvt_pointer, pool_size, dtype=f32)
    prob_copy = (1.0 - switcher) * jnp.einsum('bts,bsp->btp', alpha, pointer_oh)
    prob = prob_vocab + prob_copy
    return pred_act, prob, alpha


# ----------------------------------------------------------------------------
# Deterministic parameter construction
# ----------------------------------------------------------------------------
def make_params(key, He, H, E, A, Hh, V):
    ks = jax.random.split(key, 16)

    def w(k, shape, scale=0.1):
        return (scale * jax.random.normal(k, shape)).astype(jnp.float32)

    return dict(
        W_h0=w(ks[0], (He, H)), b_h0=w(ks[1], (1, H)),
        W_c0=w(ks[2], (He, H)), b_c0=w(ks[3], (1, H)),
        W_ih=w(ks[4], (E, 4 * H)), W_hh=w(ks[5], (H, 4 * H)), b_lstm=w(ks[6], (1, 4 * H)),
        W_act=w(ks[7], (H, A)), b_act=w(ks[8], (1, A)),
        W_att=w(ks[9], (H, He)),
        W_hid=w(ks[10], (H + He, Hh)), b_hid=w(ks[11], (1, Hh)),
        W_tok=w(ks[12], (Hh, V)), b_tok=w(ks[13], (1, V)),
        W_sw=w(ks[14], (H + He + E, 1)), b_sw=w(ks[15], (1, 1)),
    )


if __name__ == "__main__":
    key = jax.random.PRNGKey(0)
    B, S, T = 2, 16, 8
    He = H = E = Hh = 32
    A, V, pool_size = 4, 32, 48

    k_p, k_he, k_te, k_ptr = jax.random.split(key, 4)
    params = make_params(k_p, He, H, E, A, Hh, V)

    h_e = jax.random.normal(k_he, (B, S, He), dtype=jnp.float32)
    src_len = jnp.array([S, 12], dtype=jnp.int32)
    source_mask = (jnp.arange(S)[None, :] < src_len[:, None]).astype(jnp.float32)
    target_emb = jax.random.normal(k_te, (B, T, E), dtype=jnp.float32)
    len_target = jnp.array([T, 5], dtype=jnp.int32)
    lvt_pointer = jax.random.randint(k_ptr, (B, S), 0, pool_size, dtype=jnp.int32)

    (pred_act, prob, alpha), _ = decoder_flatparse_forward(
        params, pool_size, lvt_pointer, h_e, source_mask, target_emb, len_target)
    jax.block_until_ready((pred_act, prob, alpha))

    # Oracle at full f32 matmul precision; kernels run at hardware-default MXU
    # precision plus approx EUP reciprocals, hence the 1e-2 tolerance.
    with jax.default_matmul_precision("highest"):
        ref_pred_act, ref_prob, ref_alpha = reference_forward(
            params, pool_size, lvt_pointer, h_e, source_mask, target_emb, len_target)
        jax.block_until_ready((ref_pred_act, ref_prob, ref_alpha))

    np.testing.assert_allclose(np.asarray(pred_act), np.asarray(ref_pred_act),
                               rtol=1e-2, atol=1e-2)
    np.testing.assert_allclose(np.asarray(prob), np.asarray(ref_prob),
                               rtol=1e-2, atol=1e-2)
    np.testing.assert_allclose(np.asarray(alpha), np.asarray(ref_alpha),
                               rtol=1e-2, atol=1e-2)

    print("KERNEL_OK")
</pallas_src>

<mosaic_0001>
module attributes {stable_mosaic.version = 11 : i64} {
  func.func @_init_kernel(%arg0: i32, %arg1: memref<1x16x32xf32, #tpu.memory_space<vmem>>, %arg2: memref<1x1x16xf32, #tpu.memory_space<vmem>>, %arg3: memref<32x64xf32, #tpu.memory_space<vmem>>, %arg4: memref<1x64xf32, #tpu.memory_space<vmem>>, %arg5: memref<1x1x64xf32, #tpu.memory_space<vmem>>) attributes {dimension_semantics = [#tpu.dimension_semantics<parallel>], iteration_bounds = array<i64: 2>, scalar_prefetch = 0 : i64, scratch_operands = 0 : i64, tpu.core_type = #tpu.core_type<tc>, window_params = [{transform_indices = @transform_0, window_bounds = array<i64: 1, 16, 32>}, {transform_indices = @transform_1, window_bounds = array<i64: 1, 1, 16>}, {pipeline_mode = #tpu.pipeline_mode<synchronous>, transform_indices = @transform_2, window_bounds = array<i64: 32, 64>}, {pipeline_mode = #tpu.pipeline_mode<synchronous>, transform_indices = @transform_3, window_bounds = array<i64: 1, 64>}, {transform_indices = @transform_4, window_bounds = array<i64: 1, 1, 64>}]} {
    %c0 = arith.constant 0 : index
    %c0_0 = arith.constant 0 : index
    %c0_1 = arith.constant 0 : index
    %0 = vector.load %arg1[%c0, %c0_0, %c0_1] : memref<1x16x32xf32, #tpu.memory_space<vmem>>, vector<1x16x32xf32>
    %1 = vector.shape_cast %0 : vector<1x16x32xf32> to vector<16x32xf32>
    %c0_2 = arith.constant 0 : index
    %c0_3 = arith.constant 0 : index
    %c0_4 = arith.constant 0 : index
    %2 = vector.load %arg2[%c0_2, %c0_3, %c0_4] : memref<1x1x16xf32, #tpu.memory_space<vmem>>, vector<1x1x16xf32>
    %3 = vector.shape_cast %2 : vector<1x1x16xf32> to vector<1x16xf32>
    %cst = arith.constant dense<0.000000e+00> : vector<1x32xf32>
    %4 = tpu.matmul %3, %1, %cst {dimension_numbers = #tpu.dot_dimension_numbers<[1], [0], [0], [1], [0, 0, 1, 1], [], []>} : vector<1x16xf32>, vector<16x32xf32>, vector<1x32xf32> -> vector<1x32xf32>
    %cst_5 = arith.constant dense<0.000000e+00> : vector<1xf32>
    %5 = vector.multi_reduction <add>, %3, %cst_5 [1] : vector<1x16xf32> to vector<1xf32>
    %6 = vector.shape_cast %5 : vector<1xf32> to vector<1x1xf32>
    %cst_6 = arith.constant 1.000000e+00 : f32
    %7 = vector.broadcast %cst_6 : f32 to vector<1x1xf32>
    %8 = arith.maximumf %6, %7 : vector<1x1xf32>
    %9 = tpu.reciprocal %8 {approx = true} : vector<1x1xf32> -> vector<1x1xf32>
    %10 = vector.broadcast %9 : vector<1x1xf32> to vector<1x32xf32>
    %11 = arith.mulf %4, %10 : vector<1x32xf32>
    %c0_7 = arith.constant 0 : index
    %c0_8 = arith.constant 0 : index
    %12 = vector.load %arg3[%c0_7, %c0_8] : memref<32x64xf32, #tpu.memory_space<vmem>>, vector<32x64xf32>
    %cst_9 = arith.constant dense<0.000000e+00> : vector<1x64xf32>
    %13 = tpu.matmul %11, %12, %cst_9 {dimension_numbers = #tpu.dot_dimension_numbers<[1], [0], [0], [1], [0, 0, 1, 1], [], []>} : vector<1x32xf32>, vector<32x64xf32>, vector<1x64xf32> -> vector<1x64xf32>
    %c0_10 = arith.constant 0 : index
    %c0_11 = arith.constant 0 : index
    %14 = vector.load %arg4[%c0_10, %c0_11] : memref<1x64xf32, #tpu.memory_space<vmem>>, vector<1x64xf32>
    %15 = arith.addf %13, %14 : vector<1x64xf32>
    %16 = math.tanh %15 : vector<1x64xf32>
    %c0_12 = arith.constant 0 : index
    %c0_13 = arith.constant 0 : index
    %c0_14 = arith.constant 0 : index
    %17 = vector.load %arg5[%c0_12, %c0_13, %c0_14] : memref<1x1x64xf32, #tpu.memory_space<vmem>>, vector<1x1x64xf32>
    %18 = vector.shape_cast %17 : vector<1x1x64xf32> to vector<1x64xf32>
    %19 = vector.shape_cast %16 : vector<1x64xf32> to vector<1x1x64xf32>
    tpu.vector_store %arg5[%c0_12, %c0_13, %c0_14], %19 {strides = array<i32>} : memref<1x1x64xf32, #tpu.memory_space<vmem>>, vector<1x1x64xf32>,
    return
  }
  func.func @transform_0(%arg0: i32) -> (i32, i32, i32) {
    %c0_i32 = arith.constant 0 : i32
    %c0_i32_0 = arith.constant 0 : i32
    %c0_i32_1 = arith.constant 0 : i32
    return %arg0, %c0_i32, %c0_i32_0 : i32, i32, i32
  }
  func.func @transform_1(%arg0: i32) -> (i32, i32, i32) {
    %c0_i32 = arith.constant 0 : i32
    %c0_i32_0 = arith.constant 0 : i32
    %c0_i32_1 = arith.constant 0 : i32
    return %arg0, %c0_i32, %c0_i32_0 : i32, i32, i32
  }
  func.func @transform_2(%arg0: i32) -> (i32, i32) {
    %c0_i32 = arith.constant 0 : i32
    %c0_i32_0 = arith.constant 0 : i32
    %c0_i32_1 = arith.constant 0 : i32
    return %c0_i32, %c0_i32_0 : i32, i32
  }
  func.func @transform_3(%arg0: i32) -> (i32, i32) {
    %c0_i32 = arith.constant 0 : i32
    %c0_i32_0 = arith.constant 0 : i32
    %c0_i32_1 = arith.constant 0 : i32
    return %c0_i32, %c0_i32_0 : i32, i32
  }
  func.func @transform_4(%arg0: i32) -> (i32, i32, i32) {
    %c0_i32 = arith.constant 0 : i32
    %c0_i32_0 = arith.constant 0 : i32
    %c0_i32_1 = arith.constant 0 : i32
    return %arg0, %c0_i32, %c0_i32_0 : i32, i32, i32
  }
}

</mosaic_0001>

<llo_original>
// kernel: tpu_custom_call.1
$region0: #{tpu_custom_call.1}
  #allocation0 [shape = 'u32[]', space=smem, size = 0x4, offset = 0x4, fixed_abs, tag = 'smem constant byte address 0x4 - core index']
  #allocation1 [shape = 'u32[72,128]{1,0:T(1,128)}', space=vmem, size = 0x9000, scoped, tag = 'internal scratch']
  %s0 = inlined_call_operand.hbm [shape: f32[2,16,32], index: 0, kind: input, shape index: {}]
  %s1 = inlined_call_operand.hbm [shape: f32[2,1,16], index: 1, kind: input, shape index: {}]
  %s2 = inlined_call_operand.hbm [shape: f32[32,64], index: 2, kind: input, shape index: {}]
  %s3 = inlined_call_operand.vmem [shape: f32[1,64], index: 3, kind: input, shape index: {}]
  %s4 = inlined_call_operand.hbm [shape: f32[2,1,64], index: 4, kind: output, shape index: {}]
  %s5 = sld [smem:[#allocation0]]
  $region61: #{tpu_custom_call.1} parent=0
    _
  %s7 = ssub.s32 1, %s5
  %s8 = scalar_select 0, %s7, %s5
  $region1: #{tpu_custom_call.1} parent=0
    #allocation2 [shape = 'u8[16384]{0}', space=vmem, size = 0x4000, scoped, tag = 'input window, operand 0']
    #allocation3 [shape = 's32[2]{0}', space=sflag, size = 0x8, scoped, tag = 'scoped memory for tpu_custom_call.1']
    #allocation4 [shape = 's32[2]{0}', space=sflag, size = 0x8, scoped, tag = 'scoped memory for tpu_custom_call.1']
    #allocation5 [shape = 'u8[1024]{0}', space=vmem, size = 0x400, scoped, tag = 'input window, operand 1']
    #allocation6 [shape = 's32[2]{0}', space=sflag, size = 0x8, scoped, tag = 'scoped memory for tpu_custom_call.1']
    #allocation7 [shape = 'u8[16384]{0}', space=vmem, size = 0x4000, scoped, tag = 'input window, operand 2, single buffered']
    #allocation8 [shape = 'u8[1024]{0}', space=vmem, size = 0x400, scoped, tag = 'output window, operand 0']
    %9 = vsyncpa [#allocation3], 0
    %s10 = scalar_lea.sflag [#allocation3], 1
    %11 = vsyncpa %s10, 0
    %12 = vsyncpa [#allocation6], 0
    %s13 = scalar_lea.sflag [#allocation6], 1
    %14 = vsyncpa %s13, 0
    %15 = vsyncpa [#allocation4], 0
    %s16 = scalar_lea.sflag [#allocation4], 1
    %17 = vsyncpa %s16, 0
    loop: start=0, step=1, limit=4
    $region2: #{tpu_custom_call.1} parent=1 // loop_pre_header
      _
    $region3: #{tpu_custom_call.1} parent=1 // loop_header
      %s19 = sphi 0, %s23
      %p20 = scmp.ge.s32.totalorder %s19, 4
      %s29 = sphi 0, %s31
      %s32 = sphi 0, %s29
      %s33 = sphi 0, %s32
      %s49 = sphi 0, %s33
      %s55 = sphi 0, %s57
      %s58 = sphi 0, %s55
      %s59 = sphi 0, %s58
      %s75 = sphi 0, %s59
      %s79 = sphi 0, %s79
      %s81 = sphi 0, %s79
      %s82 = sphi 0, %s81
      %s96 = sphi 0, %s82
      %s100 = sphi 0, %s100
      %s102 = sphi 0, %s100
      %s103 = sphi 0, %s102
      %s117 = sphi 0, %s103
      %s123 = sphi 0, %s125
      %s126 = sphi 0, %s123
      %s127 = sphi 0, %s126
      %s143 = sphi 0, %s127
    $region4: #{tpu_custom_call.1} parent=1 // loop_header_branch
      %22 = sbr.rel (%p20) target = $region8
    $region5: #{tpu_custom_call.1} parent=1 // loop_body
      %s24 = ssub.s32 %s19, 1
      %s25 = ssub.s32 %s19, 2
      %s26 = sadd.s32 %s19, 1
      %s27 = ssub.s32 %s19, %s26
      %p28 = scmp.eq.s32.totalorder %s27, 0
      %s30 = sadd.s32 %s29, 1
      %s31 = scalar_select %p28, %s29, %s30
      %p34 = pneg %p28
      %p35 = scmp.eq.s32.totalorder %s19, 1
      %p36 = por %p34, %p35
      %p37 = scmp.ne.s32.totalorder %s29, %s32
      %p38 = scmp.eq.s32.totalorder %s19, 0
      %p39 = por %p37, %p38
      %p40 = scmp.ne.s32.totalorder %s29, %s32
      %p41 = scmp.eq.s32.totalorder %s24, 1
      %p42 = por %p40, %p41
      %p43 = scmp.ne.s32.totalorder %s32, %s33
      %p44 = scmp.eq.s32.totalorder %s24, 0
      %p45 = por %p43, %p44
      %p46 = scmp.ne.s32.totalorder %s32, %s33
      %p47 = scmp.eq.s32.totalorder %s25, 1
      %p48 = por %p46, %p47
      %p50 = scmp.ne.s32.totalorder %s33, %s49
      %p51 = scmp.eq.s32.totalorder %s25, 0
      %p52 = por %p50, %p51
      %s53 = ssub.s32 %s19, %s26
      %p54 = scmp.eq.s32.totalorder %s53, 0
      %s56 = sadd.s32 %s55, 1
      %s57 = scalar_select %p54, %s55, %s56
      %p60 = pneg %p54
      %p61 = scmp.eq.s32.totalorder %s19, 1
      %p62 = por %p60, %p61
      %p63 = scmp.ne.s32.totalorder %s55, %s58
      %p64 = scmp.eq.s32.totalorder %s19, 0
      %p65 = por %p63, %p64
      %p66 = scmp.ne.s32.totalorder %s55, %s58
      %p67 = scmp.eq.s32.totalorder %s24, 1
      %p68 = por %p66, %p67
      %p69 = scmp.ne.s32.totalorder %s58, %s59
      %p70 = scmp.eq.s32.totalorder %s24, 0
      %p71 = por %p69, %p70
      %p72 = scmp.ne.s32.totalorder %s58, %s59
      %p73 = scmp.eq.s32.totalorder %s25, 1
      %p74 = por %p72, %p73
      %p76 = scmp.ne.s32.totalorder %s59, %s75
      %p77 = scmp.eq.s32.totalorder %s25, 0
      %p78 = por %p76, %p77
      %s80 = sadd.s32 %s79, 1
      %p83 = scmp.eq.s32.totalorder %s19, 1
      %p84 = scmp.ne.s32.totalorder %s79, %s81
      %p85 = scmp.eq.s32.totalorder %s19, 0
      %p86 = por %p84, %p85
      %p87 = scmp.ne.s32.totalorder %s79, %s81
      %p88 = scmp.eq.s32.totalorder %s24, 1
      %p89 = por %p87, %p88
      %p90 = scmp.ne.s32.totalorder %s81, %s82
      %p91 = scmp.eq.s32.totalorder %s24, 0
      %p92 = por %p90, %p91
      %p93 = scmp.ne.s32.totalorder %s81, %s82
      %p94 = scmp.eq.s32.totalorder %s25, 1
      %p95 = por %p93, %p94
      %p97 = scmp.ne.s32.totalorder %s82, %s96
      %p98 = scmp.eq.s32.totalorder %s25, 0
      %p99 = por %p97, %p98
      %s101 = sadd.s32 %s100, 1
      %p104 = scmp.eq.s32.totalorder %s19, 1
      %p105 = scmp.ne.s32.totalorder %s100, %s102
      %p106 = scmp.eq.s32.totalorder %s19, 0
      %p107 = por %p105, %p106
      %p108 = scmp.ne.s32.totalorder %s100, %s102
      %p109 = scmp.eq.s32.totalorder %s24, 1
      %p110 = por %p108, %p109
      %p111 = scmp.ne.s32.totalorder %s102, %s103
      %p112 = scmp.eq.s32.totalorder %s24, 0
      %p113 = por %p111, %p112
      %p114 = scmp.ne.s32.totalorder %s102, %s103
      %p115 = scmp.eq.s32.totalorder %s25, 1
      %p116 = por %p114, %p115
      %p118 = scmp.ne.s32.totalorder %s103, %s117
      %p119 = scmp.eq.s32.totalorder %s25, 0
      %p120 = por %p118, %p119
      %s121 = ssub.s32 %s19, %s26
      %p122 = scmp.eq.s32.totalorder %s121, 0
      %s124 = sadd.s32 %s123, 1
      %s125 = scalar_select %p122, %s123, %s124
      %p128 = pneg %p122
      %p129 = scmp.eq.s32.totalorder %s19, 1
      %p130 = por %p128, %p129
      %p131 = scmp.ne.s32.totalorder %s123, %s126
      %p132 = scmp.eq.s32.totalorder %s19, 0
      %p133 = por %p131, %p132
      %p134 = scmp.ne.s32.totalorder %s123, %s126
      %p135 = scmp.eq.s32.totalorder %s24, 1
      %p136 = por %p134, %p135
      %p137 = scmp.ne.s32.totalorder %s126, %s127
      %p138 = scmp.eq.s32.totalorder %s24, 0
      %p139 = por %p137, %p138
      %p140 = scmp.ne.s32.totalorder %s126, %s127
      %p141 = scmp.eq.s32.totalorder %s25, 1
      %p142 = por %p140, %p141
      %p144 = scmp.ne.s32.totalorder %s127, %s143
      %p145 = scmp.eq.s32.totalorder %s25, 0
      %p146 = por %p144, %p145
      %p147 = scmp.le.s32.totalorder 1, %s19
      %p148 = scmp.lt.s32.totalorder %s19, 3
      %p149 = pnand %p147, %p148
      %p150 = pneg %p149
      // Predicated region
      $region9: #{tpu_custom_call.1} parent=5 // pred_check
        _
      $region10: #{tpu_custom_call.1} parent=5 // pred_check_branch
        %152 = sbr.rel (%p149) target = $region12
      $region11: #{tpu_custom_call.1} parent=5 // pred_region
        %s153 = ssub.s32 %s19, 1
        // Predicated region
        $region13: #{tpu_custom_call.1} parent=11 // pred_check
          %p154 = pneg %p92
        $region14: #{tpu_custom_call.1} parent=11 // pred_check_branch
          %156 = sbr.rel (%p154) target = $region16
        $region15: #{tpu_custom_call.1} parent=11 // pred_region
          %158 = vsyncadd [#allocation6], 0
          %s159 = sshll.u32 %s2, 4
          %s160 = int_to_ptr.hbm [resolvable:$true] %s159
          %s161 = sshll.u32 [#allocation7], 4
          %s162 = int_to_ptr.vmem [resolvable:$true] %s161
          %167 = dma.hbm_to_vmem [thread:$0]  %s160, 512, %s162, [#allocation6], 128, 128, 8
        $region16: #{tpu_custom_call.1} parent=11 // pred_fallthru
          _
        // Predicated region
        $region17: #{tpu_custom_call.1} parent=11 // pred_check
          %p168 = pneg %p113
        $region18: #{tpu_custom_call.1} parent=11 // pred_check_branch
          %170 = sbr.rel (%p168) target = $region20
        $region19: #{tpu_custom_call.1} parent=11 // pred_region
          _
        $region20: #{tpu_custom_call.1} parent=11 // pred_fallthru
          _
      $region12: #{tpu_custom_call.1} parent=5 // pred_fallthru
        _
      %p171 = scmp.lt.s32.totalorder %s19, 2
      // Predicated region
      $region21: #{tpu_custom_call.1} parent=5 // pred_check
        %p172 = pneg %p171
      $region22: #{tpu_custom_call.1} parent=5 // pred_check_branch
        %174 = sbr.rel (%p172) target = $region24
      $region23: #{tpu_custom_call.1} parent=5 // pred_region
        // Predicated region
        $region25: #{tpu_custom_call.1} parent=23 // pred_check
          %p175 = pneg %p39
        $region26: #{tpu_custom_call.1} parent=23 // pred_check_branch
          %177 = sbr.rel (%p175) target = $region28
        $region27: #{tpu_custom_call.1} parent=23 // pred_region
          %s178 = sand.u32 %s29, 1
          %s179 = scalar_lea.sflag [#allocation3], %s178
          %s180 = sand.u32 %s29, 1
          %s181 = smul.addr %s180, 16
          %s182 = scalar_lea.vmem [#allocation2], %s181
          %184 = vsyncadd %s179, 0
          %s185 = smul.addr %s19, 2
          %s186 = smul.addr %s185, 8
          %s187 = scalar_lea.hbm %s0, %s186
          %s188 = sshll.u32 %s187, 4
          %s189 = int_to_ptr.hbm [resolvable:$true] %s188
          %s190 = sshll.u32 %s182, 4
          %s191 = int_to_ptr.vmem [resolvable:$true] %s190
          %196 = dma.hbm_to_vmem [thread:$0]  %s189, 256, %s191, %s179, 128, 128, 8
        $region28: #{tpu_custom_call.1} parent=23 // pred_fallthru
          _
        // Predicated region
        $region29: #{tpu_custom_call.1} parent=23 // pred_check
          %p197 = pneg %p65
        $region30: #{tpu_custom_call.1} parent=23 // pred_check_branch
          %199 = sbr.rel (%p197) target = $region32
        $region31: #{tpu_custom_call.1} parent=23 // pred_region
          %s200 = sand.u32 %s19, 1
          %s201 = scalar_lea.sflag [#allocation6], %s200
          %s202 = sand.u32 %s55, 1
          %s203 = scalar_lea.vmem [#allocation5], %s202
          %205 = vsyncadd %s201, 0
          %s206 = scalar_lea.hbm %s1, %s19
          %s208 = sshll.u32 %s206, 4
          %s209 = int_to_ptr.hbm [resolvable:$true] %s208
          %s210 = sshll.u32 %s203, 4
          %s211 = int_to_ptr.vmem [resolvable:$true] %s210
          %213 = dma.hbm_to_vmem [thread:$0]  %s209, 16, %s211, %s201
        $region32: #{tpu_custom_call.1} parent=23 // pred_fallthru
          _
      $region24: #{tpu_custom_call.1} parent=5 // pred_fallthru
        _
      %p214 = scmp.le.s32.totalorder 1, %s19
      %p215 = scmp.lt.s32.totalorder %s19, 3
      %p216 = pnand %p214, %p215
      %p217 = pneg %p216
      // Predicated region
      $region33: #{tpu_custom_call.1} parent=5 // pred_check
        _
      $region34: #{tpu_custom_call.1} parent=5 // pred_check_branch
        %219 = sbr.rel (%p216) target = $region36
      $region35: #{tpu_custom_call.1} parent=5 // pred_region
        %s220 = ssub.s32 %s19, 1
        %s221 = sand.u32 %s32, 1
        %s222 = scalar_lea.sflag [#allocation3], %s221
        %s223 = sand.u32 %s32, 1
        %s224 = smul.addr %s223, 16
        %s225 = scalar_lea.vmem [#allocation2], %s224
        // Predicated region
        $region37: #{tpu_custom_call.1} parent=35 // pred_check
          %p226 = pneg %p45
        $region38: #{tpu_custom_call.1} parent=35 // pred_check_branch
          %228 = sbr.rel (%p226) target = $region40
        $region39: #{tpu_custom_call.1} parent=35 // pred_region
          %230 = dma.done %s222, 256
        $region40: #{tpu_custom_call.1} parent=35 // pred_fallthru
          _
        %s231 = sand.u32 %s24, 1
        %s232 = scalar_lea.sflag [#allocation6], %s231
        %s233 = sand.u32 %s58, 1
        %s234 = scalar_lea.vmem [#allocation5], %s233
        // Predicated region
        $region41: #{tpu_custom_call.1} parent=35 // pred_check
          %p235 = pneg %p71
        $region42: #{tpu_custom_call.1} parent=35 // pred_check_branch
          %237 = sbr.rel (%p235) target = $region44
        $region43: #{tpu_custom_call.1} parent=35 // pred_region
          %239 = dma.done %s232, 16
        $region44: #{tpu_custom_call.1} parent=35 // pred_fallthru
          _
        // Predicated region
        $region45: #{tpu_custom_call.1} parent=35 // pred_check
          %p240 = pneg %p92
        $region46: #{tpu_custom_call.1} parent=35 // pred_check_branch
          %242 = sbr.rel (%p240) target = $region48
        $region47: #{tpu_custom_call.1} parent=35 // pred_region
          %244 = dma.done [#allocation6], 512
        $region48: #{tpu_custom_call.1} parent=35 // pred_fallthru
          _
        %s245 = sand.u32 %s32, 1
        %s246 = scalar_lea.sflag [#allocation3], %s245
        %s247 = sand.u32 %s32, 1
        %s248 = smul.addr %s247, 16
        %s249 = scalar_lea.vmem [#allocation2], %s248
        %p250 = pneg %p45
        %p251 = pneg %p42
        %s252 = sand.u32 %s24, 1
        %s253 = scalar_lea.sflag [#allocation6], %s252
        %s254 = sand.u32 %s58, 1
        %s255 = scalar_lea.vmem [#allocation5], %s254
        %p256 = pneg %p71
        %p257 = pneg %p68
        %p258 = pneg %p92
        %p259 = pneg %p89
        %p260 = pneg %p113
        %p261 = pneg %p110
        %p262 = pneg %p139
        %p263 = pneg %p136
        %s264 = sand.u32 %s126, 1
        %s265 = scalar_lea.sflag [#allocation4], %s264
        %s266 = sand.u32 %s126, 1
        %s267 = scalar_lea.vmem [#allocation8], %s266
        %v268 = vld [vmem:[%s225] sm:$0xff]
        %v269 = vld [vmem:[%s225 + $0x8] sm:$0xff]
        %v270 = vld [vmem:[%s234] sm:$0x1]
        %vm271 = vcmask 130048
        %v273 = vsel %vm271, %v270, 0
        %275 = vmatpush.msra.mxu0 0.0
        %276 = vmatpush.msra.mxu0 0.0
        %277 = vmatpush.msra.mxu0 0.0
        %278 = vmatpush.msra.mxu0 0.0
        %279 = vmatpush.msra.mxu0 0.0
        %280 = vmatpush.msra.mxu0 0.0
        %281 = vmatpush.msra.mxu0 0.0
        %282 = vmatpush.msra.mxu0 0.0
        %283 = vmatpush.msra.mxu0 0.0
        %284 = vmatpush.msra.mxu0 0.0
        %285 = vmatpush.msra.mxu0 0.0
        %286 = vmatpush.msra.mxu0 0.0
        %287 = vmatpush.msra.mxu0 0.0
        %288 = vmatpush.msra.mxu0 0.0
        %289 = vmatpush.msra.mxu0 %v269
        %290 = vmatpush.msra.mxu0 %v268
        %291 = vmatmul.f32.gmra.mxu0 %v273
        %v292 = vpop.f32.mrf.mxu0
        %v293 = vadd.f32 0.0, %v292
        %294 = vdwg.mxu0
        %vm295 = vcmask 122880
        %v296 = vsel %vm295, %v270, 0.0
        %297 = vadd.xlane.f32.xlu0 %v296
        %v298 = vpop.xlane.xlu0 %297
        %v299 = vmax.f32 %v298, 1.0
        %v300 = vrcp.pop %v299
        %v301 = vmul.f32 %v293, %v300
        %v302 = vld [vmem:[#allocation7] sm:$0xff]
        %v303 = vld [vmem:[#allocation7 + $0x8] sm:$0xff]
        %v304 = vld [vmem:[#allocation7 + $0x10] sm:$0xff]
        %v305 = vld [vmem:[#allocation7 + $0x18] sm:$0xff]
        %v306 = vld [vmem:[%s3] sm:$0x1]
        %vm307 = vcmask 261120
        %v309 = vsel %vm307, %v301, 0
        %311 = vmatpush.msra.mxu0 0.0
        %312 = vmatpush.msra.mxu0 0.0
        %313 = vmatpush.msra.mxu0 0.0
        %314 = vmatpush.msra.mxu0 0.0
        %315 = vmatpush.msra.mxu0 0.0
        %316 = vmatpush.msra.mxu0 0.0
        %317 = vmatpush.msra.mxu0 0.0
        %318 = vmatpush.msra.mxu0 0.0
        %319 = vmatpush.msra.mxu0 0.0
        %320 = vmatpush.msra.mxu0 0.0
        %321 = vmatpush.msra.mxu0 0.0
        %322 = vmatpush.msra.mxu0 0.0
        %323 = vmatpush.msra.mxu0 %v305
        %324 = vmatpush.msra.mxu0 %v304
        %325 = vmatpush.msra.mxu0 %v303
        %326 = vmatpush.msra.mxu0 %v302
        %327 = vmatmul.f32.gmra.mxu0 %v309
        %v328 = vpop.f32.mrf.mxu0
        %v329 = vadd.f32 %v306, %v328
        %330 = vdwg.mxu0
        %v331 = vtanh.pop %v329
        %vm332 = vcmask 516096
        %333 = vst.msk [vmem:[%s267] sm:$0x1] %vm332, %v331
        %s334 = sand.u32 %s126, 1
        %s335 = scalar_lea.sflag [#allocation4], %s334
        %s336 = sand.u32 %s126, 1
        %s337 = scalar_lea.vmem [#allocation8], %s336
        // Predicated region
        $region49: #{tpu_custom_call.1} parent=35 // pred_check
          %p338 = pneg %p136
        $region50: #{tpu_custom_call.1} parent=35 // pred_check_branch
          %340 = sbr.rel (%p338) target = $region52
        $region51: #{tpu_custom_call.1} parent=35 // pred_region
          %342 = vsyncadd %s335, 0
          %s343 = scalar_lea.hbm %s4, %s24
          %s345 = sshll.u32 %s337, 4
          %s346 = int_to_ptr.vmem [resolvable:$true] %s345
          %s347 = sshll.u32 %s343, 4
          %s348 = int_to_ptr.hbm [resolvable:$true] %s347
          %350 = dma.vmem_to_hbm [thread:$0]  %s346, 16, %s348, %s335
        $region52: #{tpu_custom_call.1} parent=35 // pred_fallthru
          _
      $region36: #{tpu_custom_call.1} parent=5 // pred_fallthru
        _
      %p351 = scmp.le.s32.totalorder 2, %s19
      // Predicated region
      $region53: #{tpu_custom_call.1} parent=5 // pred_check
        %p352 = pneg %p351
      $region54: #{tpu_custom_call.1} parent=5 // pred_check_branch
        %354 = sbr.rel (%p352) target = $region56
      $region55: #{tpu_custom_call.1} parent=5 // pred_region
        %s355 = ssub.s32 %s19, 2
        // Predicated region
        $region57: #{tpu_custom_call.1} parent=55 // pred_check
          %p356 = pneg %p142
        $region58: #{tpu_custom_call.1} parent=55 // pred_check_branch
          %358 = sbr.rel (%p356) target = $region60
        $region59: #{tpu_custom_call.1} parent=55 // pred_region
          %s359 = sand.u32 %s127, 1
          %s360 = scalar_lea.sflag [#allocation4], %s359
          %s361 = sand.u32 %s127, 1
          %s362 = scalar_lea.vmem [#allocation8], %s361
          %364 = dma.done %s360, 16
        $region60: #{tpu_custom_call.1} parent=55 // pred_fallthru
          _
      $region56: #{tpu_custom_call.1} parent=5 // pred_fallthru
        _
    $region6: #{tpu_custom_call.1} parent=1 // loop_footer
      %s23 = sadd.s32 1, %s19
    $region7: #{tpu_custom_call.1} parent=1 // loop_footer_branch
      %18 = sbr.rel target = $region3
    $region8: #{tpu_custom_call.1} parent=1 // loop_exit
      _
    %365 = vsyncpa [#allocation3], 1
    %s366 = scalar_lea.sflag [#allocation3], 1
    %367 = vsyncpa %s366, 1
    %368 = vsyncpa [#allocation6], 1
    %s369 = scalar_lea.sflag [#allocation6], 1
    %370 = vsyncpa %s369, 1
    %371 = vsyncpa [#allocation4], 1
    %s372 = scalar_lea.sflag [#allocation4], 1
    %373 = vsyncpa %s372, 1

</llo_original>
